<compile_context>
chip_gen: v7x
topology: tpu7x:2x2x1
jax: 0.10.0
libtpu: 0.0.40
codegen_flags: <defaults>
</compile_context>

<pallas_src>
from functools import partial

import jax
import jax.numpy as jnp
from jax.experimental import pallas as pl
from jax.experimental.pallas import tpu as pltpu


def _round_up(x, m):
    return ((x + m - 1) // m) * m


def conv_stats_kernel(p_ref, w_ref, g_ref, b_ref,
                      conv_ref, scale_ref, bias_ref,
                      sum_ref, ssq_ref, shift_ref, *, tm, m_valid, eps):
    """Pass 1: one bf16 matmul per tile + streamed BN statistics.

    p_ref:     (Kp, tm)  bf16 im2col patch tile (M on lanes)       [streamed]
    w_ref:     (Cp, Kp)  bf16 packed conv weights                  [resident]
    g_ref:     (Cp, 1)   BN gamma
    b_ref:     (Cp, 1)   BN beta
    conv_ref:  (Cp, tm)  f32 conv output tile                      [streamed]
    scale_ref: (Cp, 1)   f32 gamma * rsqrt(var + eps)       (written last step)
    bias_ref:  (Cp, 1)   f32 beta - mean * scale            (written last step)
    sum/ssq/shift_ref: (Cp, 1) f32 VMEM scratch accumulators.
    """
    i = pl.program_id(0)

    # Single lane-dense matmul for this tile: (Cp,Kp) x (Kp,tm) -> f32 (Cp,tm).
    conv = jnp.dot(w_ref[...], p_ref[...], preferred_element_type=jnp.float32)
    conv_ref[...] = conv

    # Mask columns past the true M (zero-padded tail of the last tile).
    col = jax.lax.broadcasted_iota(jnp.int32, (1, tm), 1) + i * tm
    valid = col < m_valid
    convm = jnp.where(valid, conv, 0.0)

    @pl.when(i == 0)
    def _init():
        # Per-channel mean of the first tile: variance pre-shift guarding
        # against E[x^2] - mean^2 cancellation for offset-heavy activations.
        n0 = min(tm, m_valid)
        shift_ref[...] = jnp.sum(convm, axis=1, keepdims=True) * (1.0 / n0)
        sum_ref[...] = jnp.zeros_like(sum_ref)
        ssq_ref[...] = jnp.zeros_like(ssq_ref)
        scale_ref[...] = jnp.zeros_like(scale_ref)
        bias_ref[...] = jnp.zeros_like(bias_ref)

    sum_ref[...] += jnp.sum(convm, axis=1, keepdims=True)
    d = jnp.where(valid, conv - shift_ref[...], 0.0)
    ssq_ref[...] += jnp.sum(d * d, axis=1, keepdims=True)

    @pl.when(i == pl.num_programs(0) - 1)
    def _finalize():
        inv_m = 1.0 / m_valid
        mean = sum_ref[...] * inv_m
        dm = mean - shift_ref[...]
        var = jnp.maximum(ssq_ref[...] * inv_m - dm * dm, 0.0)
        inv_std = jax.lax.rsqrt(var + eps)          # EUP slot, off the VALU
        sc = g_ref[...] * inv_std
        scale_ref[...] = sc
        bias_ref[...] = b_ref[...] - mean * sc


def bn_relu_kernel(conv_ref, scale_ref, bias_ref, o_ref):
    """Pass 2: per-channel affine + ReLU on streamed conv tiles."""
    o_ref[...] = jnp.maximum(conv_ref[...] * scale_ref[...] + bias_ref[...], 0.0)


def conv_bn_relu(x_nchw, w_oihw, gamma, beta, eps=1e-5, tm=256):
    """ConvBNRelu forward. x_nchw: (N, Cin, H, W); w_oihw: (Cout, Cin, KH, KW)."""
    N, Cin, H, W = x_nchw.shape
    Cout, _, KH, KW = w_oihw.shape
    pad = (KH - 1) // 2                     # 'same' padding for kernel 1 or 3

    M = N * H * W
    K = KH * KW * Cin
    Kp = _round_up(K, 16)                   # bf16 sublane tile; NOT padded to 128
    Cp = _round_up(Cout, 8)
    Mp = _round_up(M, tm)

    # --- wrapper-side layout plumbing (plain XLA) -------------------------
    # im2col with M on the trailing (lane) axis: patches[(kh*KW+kw)*Cin+ci, m].
    # TODO(synk): for large H/W, form the taps in-kernel from halo'd rows
    # (memory_space=pl.ANY + manual DMA) to avoid this im2col HBM round trip.
    x = x_nchw.astype(jnp.float32)
    xp = jnp.pad(x, ((0, 0), (0, 0), (pad, pad), (pad, pad)))
    taps = []
    for kh in range(KH):
        for kw in range(KW):
            t = jax.lax.slice(xp, (0, 0, kh, kw), (N, Cin, kh + H, kw + W))
            taps.append(jnp.transpose(t, (1, 0, 2, 3)).reshape(Cin, M))
    patches = jnp.concatenate(taps, axis=0)                        # (K, M)
    patches = jnp.pad(patches, ((0, Kp - K), (0, Mp - M))).astype(jnp.bfloat16)

    # Packed weights: w2[o, (kh*KW+kw)*Cin+ci] = w_oihw[o, ci, kh, kw]
    w2 = jnp.transpose(w_oihw, (0, 2, 3, 1)).reshape(Cout, K).astype(jnp.float32)
    w2 = jnp.pad(w2, ((0, Cp - Cout), (0, Kp - K))).astype(jnp.bfloat16)

    g = jnp.pad(gamma.astype(jnp.float32).reshape(Cout, 1), ((0, Cp - Cout), (0, 0)))
    b = jnp.pad(beta.astype(jnp.float32).reshape(Cout, 1), ((0, Cp - Cout), (0, 0)))

    grid = (Mp // tm,)

    # Pass 1: conv tiles + BN statistics (grid axis carries the reduction).
    # TODO(synk): on v7x, split this axis across both TensorCores with a tiny
    # cross-core exchange of the (Cp,1) partial sums before the finalize.
    conv, scale, bias = pl.pallas_call(
        partial(conv_stats_kernel, tm=tm, m_valid=M, eps=eps),
        out_shape=(jax.ShapeDtypeStruct((Cp, Mp), jnp.float32),
                   jax.ShapeDtypeStruct((Cp, 1), jnp.float32),
                   jax.ShapeDtypeStruct((Cp, 1), jnp.float32)),
        grid=grid,
        in_specs=[
            pl.BlockSpec((Kp, tm), lambda i: (0, i)),   # streamed patch tiles
            pl.BlockSpec((Cp, Kp), lambda i: (0, 0)),   # weights (resident)
            pl.BlockSpec((Cp, 1), lambda i: (0, 0)),    # gamma
            pl.BlockSpec((Cp, 1), lambda i: (0, 0)),    # beta
        ],
        out_specs=[
            pl.BlockSpec((Cp, tm), lambda i: (0, i)),   # conv tiles (pipelined)
            pl.BlockSpec((Cp, 1), lambda i: (0, 0)),    # scale (written last)
            pl.BlockSpec((Cp, 1), lambda i: (0, 0)),    # bias  (written last)
        ],
        scratch_shapes=[pltpu.VMEM((Cp, 1), jnp.float32),   # running sum
                        pltpu.VMEM((Cp, 1), jnp.float32),   # shifted sum of sq
                        pltpu.VMEM((Cp, 1), jnp.float32)],  # variance pre-shift
        compiler_params=pltpu.CompilerParams(
            dimension_semantics=("arbitrary",),
            vmem_limit_bytes=32 * 1024 * 1024),
    )(patches, w2, g, b)

    # Pass 2: normalize + ReLU, fully parallel tiled pass (pipelined writeback).
    out = pl.pallas_call(
        bn_relu_kernel,
        out_shape=jax.ShapeDtypeStruct((Cp, Mp), jnp.float32),
        grid=grid,
        in_specs=[
            pl.BlockSpec((Cp, tm), lambda i: (0, i)),
            pl.BlockSpec((Cp, 1), lambda i: (0, 0)),
            pl.BlockSpec((Cp, 1), lambda i: (0, 0)),
        ],
        out_specs=pl.BlockSpec((Cp, tm), lambda i: (0, i)),
        compiler_params=pltpu.CompilerParams(
            dimension_semantics=("parallel",),
            vmem_limit_bytes=32 * 1024 * 1024),
    )(conv, scale, bias)

    out = out[:Cout, :M].reshape(Cout, N, H, W)
    return jnp.transpose(out, (1, 0, 2, 3))             # -> NCHW


def _reference(x_nchw, w_oihw, gamma, beta, eps=1e-5):
    """Plain-JAX reference matching PyTorch ConvBNRelu (training-mode BN)."""
    y = jax.lax.conv_general_dilated(
        x_nchw.astype(jnp.float32), w_oihw.astype(jnp.float32),
        window_strides=(1, 1), padding="SAME",
        dimension_numbers=("NCHW", "OIHW", "NCHW"))
    mean = jnp.mean(y, axis=(0, 2, 3), keepdims=True)
    var = jnp.mean((y - mean) ** 2, axis=(0, 2, 3), keepdims=True)
    yhat = (y - mean) * jax.lax.rsqrt(var + eps)
    yhat = yhat * gamma.reshape(1, -1, 1, 1) + beta.reshape(1, -1, 1, 1)
    return jnp.maximum(yhat, 0.0)


if __name__ == "__main__":
    # ConvBNRelu(inChannels=4, outChannels=8, kernel=3, stride=1, padding='same')
    N, Cin, Cout, H, W, K = 2, 4, 8, 16, 16, 3

    key = jax.random.PRNGKey(0)
    kx, kw, kg, kb = jax.random.split(key, 4)
    x = jax.random.normal(kx, (N, Cin, H, W), dtype=jnp.float32)
    # Deterministic synthetic parameters (Conv2d weight OIHW, bias=False; BN
    # affine gamma/beta).
    # TODO(synk): running-stat (momentum) update of SynchronizedBatchNorm2d is
    # training-side state, not part of the forward math implemented here.
    w = 0.1 * jax.random.normal(kw, (Cout, Cin, K, K), dtype=jnp.float32)
    gamma = 1.0 + 0.1 * jax.random.normal(kg, (Cout,), dtype=jnp.float32)
    beta = 0.1 * jax.random.normal(kb, (Cout,), dtype=jnp.float32)

    out = jax.block_until_ready(conv_bn_relu(x, w, gamma, beta))
    ref = jax.block_until_ready(_reference(x, w, gamma, beta))

    assert out.shape == (N, Cout, H, W)
    # bf16 MXU operands shift the conv outputs (and hence the batch stats)
    # slightly vs the pure-f32 reference -> loosened tolerance per review.
    err = jnp.max(jnp.abs(out - ref))
    assert jnp.allclose(out, ref, atol=5e-2, rtol=5e-2), f"max abs err {err}"

    print("KERNEL_OK")
</pallas_src>

<mosaic_0001>
module attributes {stable_mosaic.version = 11 : i64} {
  func.func @conv_stats_kernel(%arg0: i32, %arg1: memref<48x256xbf16, #tpu.memory_space<vmem>>, %arg2: memref<8x48xbf16, #tpu.memory_space<vmem>>, %arg3: memref<8x1xf32, #tpu.memory_space<vmem>>, %arg4: memref<8x1xf32, #tpu.memory_space<vmem>>, %arg5: memref<8x256xf32, #tpu.memory_space<vmem>>, %arg6: memref<8x1xf32, #tpu.memory_space<vmem>>, %arg7: memref<8x1xf32, #tpu.memory_space<vmem>>, %arg8: memref<8x1xf32, #tpu.memory_space<vmem>>, %arg9: memref<8x1xf32, #tpu.memory_space<vmem>>, %arg10: memref<8x1xf32, #tpu.memory_space<vmem>>) attributes {dimension_semantics = [#tpu.dimension_semantics<arbitrary>], iteration_bounds = array<i64: 2>, scalar_prefetch = 0 : i64, scratch_operands = 3 : i64, tpu.core_type = #tpu.core_type<tc>, window_params = [{transform_indices = @transform_0, window_bounds = array<i64: 48, 256>}, {pipeline_mode = #tpu.pipeline_mode<synchronous>, transform_indices = @transform_1, window_bounds = array<i64: 8, 48>}, {pipeline_mode = #tpu.pipeline_mode<synchronous>, transform_indices = @transform_2, window_bounds = array<i64: 8, 1>}, {pipeline_mode = #tpu.pipeline_mode<synchronous>, transform_indices = @transform_3, window_bounds = array<i64: 8, 1>}, {transform_indices = @transform_4, window_bounds = array<i64: 8, 256>}, {pipeline_mode = #tpu.pipeline_mode<synchronous>, transform_indices = @transform_5, window_bounds = array<i64: 8, 1>}, {pipeline_mode = #tpu.pipeline_mode<synchronous>, transform_indices = @transform_6, window_bounds = array<i64: 8, 1>}]} {
    %c0 = arith.constant 0 : index
    %c0_0 = arith.constant 0 : index
    %0 = vector.load %arg2[%c0, %c0_0] : memref<8x48xbf16, #tpu.memory_space<vmem>>, vector<8x48xbf16>
    %c0_1 = arith.constant 0 : index
    %c0_2 = arith.constant 0 : index
    %1 = vector.load %arg1[%c0_1, %c0_2] : memref<48x256xbf16, #tpu.memory_space<vmem>>, vector<48x256xbf16>
    %cst = arith.constant dense<0.000000e+00> : vector<8x256xf32>
    %2 = tpu.matmul %0, %1, %cst {dimension_numbers = #tpu.dot_dimension_numbers<[1], [0], [0], [1], [0, 0, 1, 1], [], []>} : vector<8x48xbf16>, vector<48x256xbf16>, vector<8x256xf32> -> vector<8x256xf32>
    %c0_3 = arith.constant 0 : index
    %c0_4 = arith.constant 0 : index
    %3 = vector.load %arg5[%c0_3, %c0_4] : memref<8x256xf32, #tpu.memory_space<vmem>>, vector<8x256xf32>
    tpu.vector_store %arg5[%c0_3, %c0_4], %2 {strides = array<i32>} : memref<8x256xf32, #tpu.memory_space<vmem>>, vector<8x256xf32>,
    %4 = tpu.iota {dimensions = array<i32: 1>} : vector<1x256xi32>
    %c256_i32 = arith.constant 256 : i32
    %5 = arith.muli %arg0, %c256_i32 : i32
    %6 = vector.broadcast %5 : i32 to vector<1x256xi32>
    %7 = arith.addi %4, %6 : vector<1x256xi32>
    %c512_i32 = arith.constant 512 : i32
    %8 = vector.broadcast %c512_i32 : i32 to vector<1x256xi32>
    %9 = arith.cmpi slt, %7, %8 : vector<1x256xi32>
    %cst_5 = arith.constant 0.000000e+00 : f32
    %10 = vector.shape_cast %9 : vector<1x256xi1> to vector<1x256xi1>
    %11 = vector.broadcast %10 : vector<1x256xi1> to vector<8x256xi1>
    %12 = vector.broadcast %cst_5 : f32 to vector<8x256xf32>
    %13 = arith.select %11, %2, %12 : vector<8x256xi1>, vector<8x256xf32>
    %c0_i32 = arith.constant 0 : i32
    %14 = arith.cmpi eq, %arg0, %c0_i32 : i32
    %15 = arith.extui %14 : i1 to i32
    %c0_i32_6 = arith.constant 0 : i32
    %16 = arith.cmpi ne, %15, %c0_i32_6 : i32
    scf.if %16 {
      %cst_21 = arith.constant dense<0.000000e+00> : vector<8xf32>
      %38 = vector.multi_reduction <add>, %13, %cst_21 [1] : vector<8x256xf32> to vector<8xf32>
      %39 = vector.shape_cast %38 : vector<8xf32> to vector<8x1xf32>
      %cst_22 = arith.constant 3.906250e-03 : f32
      %40 = vector.broadcast %cst_22 : f32 to vector<8x1xf32>
      %41 = arith.mulf %39, %40 : vector<8x1xf32>
      %c0_23 = arith.constant 0 : index
      %c0_24 = arith.constant 0 : index
      %42 = vector.load %arg10[%c0_23, %c0_24] : memref<8x1xf32, #tpu.memory_space<vmem>>, vector<8x1xf32>
      tpu.vector_store %arg10[%c0_23, %c0_24], %41 {strides = array<i32>} : memref<8x1xf32, #tpu.memory_space<vmem>>, vector<8x1xf32>,
      %cst_25 = arith.constant 0.000000e+00 : f32
      %43 = vector.broadcast %cst_25 : f32 to vector<8x1xf32>
      %c0_26 = arith.constant 0 : index
      %c0_27 = arith.constant 0 : index
      %44 = vector.load %arg8[%c0_26, %c0_27] : memref<8x1xf32, #tpu.memory_space<vmem>>, vector<8x1xf32>
      tpu.vector_store %arg8[%c0_26, %c0_27], %43 {strides = array<i32>} : memref<8x1xf32, #tpu.memory_space<vmem>>, vector<8x1xf32>,
      %cst_28 = arith.constant 0.000000e+00 : f32
      %45 = vector.broadcast %cst_28 : f32 to vector<8x1xf32>
      %c0_29 = arith.constant 0 : index
      %c0_30 = arith.constant 0 : index
      %46 = vector.load %arg9[%c0_29, %c0_30] : memref<8x1xf32, #tpu.memory_space<vmem>>, vector<8x1xf32>
      tpu.vector_store %arg9[%c0_29, %c0_30], %45 {strides = array<i32>} : memref<8x1xf32, #tpu.memory_space<vmem>>, vector<8x1xf32>,
      %cst_31 = arith.constant 0.000000e+00 : f32
      %47 = vector.broadcast %cst_31 : f32 to vector<8x1xf32>
      %c0_32 = arith.constant 0 : index
      %c0_33 = arith.constant 0 : index
      %48 = vector.load %arg6[%c0_32, %c0_33] : memref<8x1xf32, #tpu.memory_space<vmem>>, vector<8x1xf32>
      tpu.vector_store %arg6[%c0_32, %c0_33], %47 {strides = array<i32>} : memref<8x1xf32, #tpu.memory_space<vmem>>, vector<8x1xf32>,
      %cst_34 = arith.constant 0.000000e+00 : f32
      %49 = vector.broadcast %cst_34 : f32 to vector<8x1xf32>
      %c0_35 = arith.constant 0 : index
      %c0_36 = arith.constant 0 : index
      %50 = vector.load %arg7[%c0_35, %c0_36] : memref<8x1xf32, #tpu.memory_space<vmem>>, vector<8x1xf32>
      tpu.vector_store %arg7[%c0_35, %c0_36], %49 {strides = array<i32>} : memref<8x1xf32, #tpu.memory_space<vmem>>, vector<8x1xf32>,
    } else {
    }
    %c0_7 = arith.constant 0 : index
    %c0_8 = arith.constant 0 : index
    %17 = vector.load %arg8[%c0_7, %c0_8] : memref<8x1xf32, #tpu.memory_space<vmem>>, vector<8x1xf32>
    %cst_9 = arith.constant dense<0.000000e+00> : vector<8xf32>
    %18 = vector.multi_reduction <add>, %13, %cst_9 [1] : vector<8x256xf32> to vector<8xf32>
    %19 = vector.shape_cast %18 : vector<8xf32> to vector<8x1xf32>
    %20 = arith.addf %17, %19 : vector<8x1xf32>
    %c0_10 = arith.constant 0 : index
    %c0_11 = arith.constant 0 : index
    %21 = vector.load %arg8[%c0_10, %c0_11] : memref<8x1xf32, #tpu.memory_space<vmem>>, vector<8x1xf32>
    tpu.vector_store %arg8[%c0_10, %c0_11], %20 {strides = array<i32>} : memref<8x1xf32, #tpu.memory_space<vmem>>, vector<8x1xf32>,
    %c0_12 = arith.constant 0 : index
    %c0_13 = arith.constant 0 : index
    %22 = vector.load %arg10[%c0_12, %c0_13] : memref<8x1xf32, #tpu.memory_space<vmem>>, vector<8x1xf32>
    %23 = vector.broadcast %22 : vector<8x1xf32> to vector<8x256xf32>
    %24 = arith.subf %2, %23 : vector<8x256xf32>
    %cst_14 = arith.constant 0.000000e+00 : f32
    %25 = vector.shape_cast %9 : vector<1x256xi1> to vector<1x256xi1>
    %26 = vector.broadcast %25 : vector<1x256xi1> to vector<8x256xi1>
    %27 = vector.broadcast %cst_14 : f32 to vector<8x256xf32>
    %28 = arith.select %26, %24, %27 : vector<8x256xi1>, vector<8x256xf32>
    %c0_15 = arith.constant 0 : index
    %c0_16 = arith.constant 0 : index
    %29 = vector.load %arg9[%c0_15, %c0_16] : memref<8x1xf32, #tpu.memory_space<vmem>>, vector<8x1xf32>
    %30 = arith.mulf %28, %28 : vector<8x256xf32>
    %cst_17 = arith.constant dense<0.000000e+00> : vector<8xf32>
    %31 = vector.multi_reduction <add>, %30, %cst_17 [1] : vector<8x256xf32> to vector<8xf32>
    %32 = vector.shape_cast %31 : vector<8xf32> to vector<8x1xf32>
    %33 = arith.addf %29, %32 : vector<8x1xf32>
    %c0_18 = arith.constant 0 : index
    %c0_19 = arith.constant 0 : index
    %34 = vector.load %arg9[%c0_18, %c0_19] : memref<8x1xf32, #tpu.memory_space<vmem>>, vector<8x1xf32>
    tpu.vector_store %arg9[%c0_18, %c0_19], %33 {strides = array<i32>} : memref<8x1xf32, #tpu.memory_space<vmem>>, vector<8x1xf32>,
    %c1_i32 = arith.constant 1 : i32
    %35 = arith.cmpi eq, %arg0, %c1_i32 : i32
    %36 = arith.extui %35 : i1 to i32
    %c0_i32_20 = arith.constant 0 : i32
    %37 = arith.cmpi ne, %36, %c0_i32_20 : i32
    scf.if %37 {
      %c0_21 = arith.constant 0 : index
      %c0_22 = arith.constant 0 : index
      %38 = vector.load %arg8[%c0_21, %c0_22] : memref<8x1xf32, #tpu.memory_space<vmem>>, vector<8x1xf32>
      %cst_23 = arith.constant 0.001953125 : f32
      %39 = vector.broadcast %cst_23 : f32 to vector<8x1xf32>
      %40 = arith.mulf %38, %39 : vector<8x1xf32>
      %c0_24 = arith.constant 0 : index
      %c0_25 = arith.constant 0 : index
      %41 = vector.load %arg10[%c0_24, %c0_25] : memref<8x1xf32, #tpu.memory_space<vmem>>, vector<8x1xf32>
      %42 = arith.subf %40, %41 : vector<8x1xf32>
      %c0_26 = arith.constant 0 : index
      %c0_27 = arith.constant 0 : index
      %43 = vector.load %arg9[%c0_26, %c0_27] : memref<8x1xf32, #tpu.memory_space<vmem>>, vector<8x1xf32>
      %cst_28 = arith.constant 0.001953125 : f32
      %44 = vector.broadcast %cst_28 : f32 to vector<8x1xf32>
      %45 = arith.mulf %43, %44 : vector<8x1xf32>
      %46 = arith.mulf %42, %42 : vector<8x1xf32>
      %47 = arith.subf %45, %46 : vector<8x1xf32>
      %cst_29 = arith.constant 0.000000e+00 : f32
      %48 = vector.broadcast %cst_29 : f32 to vector<8x1xf32>
      %49 = arith.maximumf %47, %48 : vector<8x1xf32>
      %cst_30 = arith.constant 9.99999974E-6 : f32
      %50 = vector.broadcast %cst_30 : f32 to vector<8x1xf32>
      %51 = arith.addf %49, %50 : vector<8x1xf32>
      %52 = math.rsqrt %51 : vector<8x1xf32>
      %c0_31 = arith.constant 0 : index
      %c0_32 = arith.constant 0 : index
      %53 = vector.load %arg3[%c0_31, %c0_32] : memref<8x1xf32, #tpu.memory_space<vmem>>, vector<8x1xf32>
      %54 = arith.mulf %53, %52 : vector<8x1xf32>
      %c0_33 = arith.constant 0 : index
      %c0_34 = arith.constant 0 : index
      %55 = vector.load %arg6[%c0_33, %c0_34] : memref<8x1xf32, #tpu.memory_space<vmem>>, vector<8x1xf32>
      tpu.vector_store %arg6[%c0_33, %c0_34], %54 {strides = array<i32>} : memref<8x1xf32, #tpu.memory_space<vmem>>, vector<8x1xf32>,
      %c0_35 = arith.constant 0 : index
      %c0_36 = arith.constant 0 : index
      %56 = vector.load %arg4[%c0_35, %c0_36] : memref<8x1xf32, #tpu.memory_space<vmem>>, vector<8x1xf32>
      %57 = arith.mulf %40, %54 : vector<8x1xf32>
      %58 = arith.subf %56, %57 : vector<8x1xf32>
      %c0_37 = arith.constant 0 : index
      %c0_38 = arith.constant 0 : index
      %59 = vector.load %arg7[%c0_37, %c0_38] : memref<8x1xf32, #tpu.memory_space<vmem>>, vector<8x1xf32>
      tpu.vector_store %arg7[%c0_37, %c0_38], %58 {strides = array<i32>} : memref<8x1xf32, #tpu.memory_space<vmem>>, vector<8x1xf32>,
    } else {
    }
    return
  }
  func.func @transform_0(%arg0: i32) -> (i32, i32) {
    %c0_i32 = arith.constant 0 : i32
    %c0_i32_0 = arith.constant 0 : i32
    return %c0_i32, %arg0 : i32, i32
  }
  func.func @transform_1(%arg0: i32) -> (i32, i32) {
    %c0_i32 = arith.constant 0 : i32
    %c0_i32_0 = arith.constant 0 : i32
    %c0_i32_1 = arith.constant 0 : i32
    return %c0_i32, %c0_i32_0 : i32, i32
  }
  func.func @transform_2(%arg0: i32) -> (i32, i32) {
    %c0_i32 = arith.constant 0 : i32
    %c0_i32_0 = arith.constant 0 : i32
    %c0_i32_1 = arith.constant 0 : i32
    return %c0_i32, %c0_i32_0 : i32, i32
  }
  func.func @transform_3(%arg0: i32) -> (i32, i32) {
    %c0_i32 = arith.constant 0 : i32
    %c0_i32_0 = arith.constant 0 : i32
    %c0_i32_1 = arith.constant 0 : i32
    return %c0_i32, %c0_i32_0 : i32, i32
  }
  func.func @transform_4(%arg0: i32) -> (i32, i32) {
    %c0_i32 = arith.constant 0 : i32
    %c0_i32_0 = arith.constant 0 : i32
    return %c0_i32, %arg0 : i32, i32
  }
  func.func @transform_5(%arg0: i32) -> (i32, i32) {
    %c0_i32 = arith.constant 0 : i32
    %c0_i32_0 = arith.constant 0 : i32
    %c0_i32_1 = arith.constant 0 : i32
    return %c0_i32, %c0_i32_0 : i32, i32
  }
  func.func @transform_6(%arg0: i32) -> (i32, i32) {
    %c0_i32 = arith.constant 0 : i32
    %c0_i32_0 = arith.constant 0 : i32
    %c0_i32_1 = arith.constant 0 : i32
    return %c0_i32, %c0_i32_0 : i32, i32
  }
}

</mosaic_0001>

<llo_original>
// kernel: tpu_custom_call.1
$region0: #{tpu_custom_call.1}
  #allocation0 [shape = 'u32[]', space=smem, size = 0x4, offset = 0x4, fixed_abs, tag = 'smem constant byte address 0x4 - core index']
  #allocation1 [shape = 'u32[144,128]{1,0:T(1,128)}', space=vmem, size = 0x12000, scoped, tag = 'internal scratch']
  #allocation2 [shape = 'f32[8,1]{1,0:T(8,128)}', space=vmem, size = 0x1000, scoped, tag = 'scratch operand']
  #allocation3 [shape = 'f32[8,1]{1,0:T(8,128)}', space=vmem, size = 0x1000, scoped, tag = 'scratch operand']
  #allocation4 [shape = 'f32[8,1]{1,0:T(8,128)}', space=vmem, size = 0x1000, scoped, tag = 'scratch operand']
  %s0 = inlined_call_operand.hbm [shape: bf16[48,512], index: 0, kind: input, shape index: {}]
  %s1 = inlined_call_operand.vmem [shape: bf16[8,48], index: 1, kind: input, shape index: {}]
  %s2 = inlined_call_operand.vmem [shape: f32[8,1], index: 2, kind: input, shape index: {}]
  %s3 = inlined_call_operand.vmem [shape: f32[8,1], index: 3, kind: input, shape index: {}]
  %s4 = inlined_call_operand.hbm [shape: f32[8,512], index: 4, kind: output, shape index: {0}]
  %s5 = inlined_call_operand.vmem [shape: f32[8,1], index: 5, kind: output, shape index: {1}]
  %s6 = inlined_call_operand.vmem [shape: f32[8,1], index: 6, kind: output, shape index: {2}]
  %7 = xla_tuple %s4, %s5, %s6
  %s8 = sld [smem:[#allocation0]]
  $region77: #{tpu_custom_call.1} parent=0
    _
  %s10 = ssub.s32 1, %s8
  %s11 = scalar_select 0, %s10, %s8
  $region1: #{tpu_custom_call.1} parent=0
    #allocation5 [shape = 'u8[49152]{0}', space=vmem, size = 0xc000, scoped, tag = 'input window, operand 0']
    #allocation6 [shape = 's32[2]{0}', space=sflag, size = 0x8, scoped, tag = 'scoped memory for tpu_custom_call.1']
    #allocation7 [shape = 's32[2]{0}', space=sflag, size = 0x8, scoped, tag = 'scoped memory for tpu_custom_call.1']
    #allocation8 [shape = 'u8[16384]{0}', space=vmem, size = 0x4000, scoped, tag = 'output window, operand 0']
    %12 = vsyncpa [#allocation6], 0
    %s13 = scalar_lea.sflag [#allocation6], 1
    %14 = vsyncpa %s13, 0
    %15 = vsyncpa [#allocation7], 0
    %s16 = scalar_lea.sflag [#allocation7], 1
    %17 = vsyncpa %s16, 0
    loop: start=0, step=1, limit=4
    $region2: #{tpu_custom_call.1} parent=1 // loop_pre_header
      _
    $region3: #{tpu_custom_call.1} parent=1 // loop_header
      %s19 = sphi 0, %s23
      %p20 = scmp.ge.s32.totalorder %s19, 4
      %s29 = sphi 0, %s31
      %s32 = sphi 0, %s29
      %s33 = sphi 0, %s32
      %s49 = sphi 0, %s33
      %s53 = sphi 0, %s53
      %s55 = sphi 0, %s53
      %s56 = sphi 0, %s55
      %s70 = sphi 0, %s56
      %s74 = sphi 0, %s74
      %s76 = sphi 0, %s74
      %s77 = sphi 0, %s76
      %s91 = sphi 0, %s77
      %s95 = sphi 0, %s95
      %s97 = sphi 0, %s95
      %s98 = sphi 0, %s97
      %s112 = sphi 0, %s98
      %s118 = sphi 0, %s120
      %s121 = sphi 0, %s118
      %s122 = sphi 0, %s121
      %s138 = sphi 0, %s122
      %s142 = sphi 0, %s142
      %s144 = sphi 0, %s142
      %s145 = sphi 0, %s144
      %s159 = sphi 0, %s145
      %s163 = sphi 0, %s163
      %s165 = sphi 0, %s163
      %s166 = sphi 0, %s165
      %s180 = sphi 0, %s166
    $region4: #{tpu_custom_call.1} parent=1 // loop_header_branch
      %22 = sbr.rel (%p20) target = $region8
    $region5: #{tpu_custom_call.1} parent=1 // loop_body
      %s24 = ssub.s32 %s19, 1
      %s25 = ssub.s32 %s19, 2
      %s26 = sadd.s32 %s19, 1
      %s27 = ssub.s32 %s19, %s26
      %p28 = scmp.eq.s32.totalorder %s27, 0
      %s30 = sadd.s32 %s29, 1
      %s31 = scalar_select %p28, %s29, %s30
      %p34 = pneg %p28
      %p35 = scmp.eq.s32.totalorder %s19, 1
      %p36 = por %p34, %p35
      %p37 = scmp.ne.s32.totalorder %s29, %s32
      %p38 = scmp.eq.s32.totalorder %s19, 0
      %p39 = por %p37, %p38
      %p40 = scmp.ne.s32.totalorder %s29, %s32
      %p41 = scmp.eq.s32.totalorder %s24, 1
      %p42 = por %p40, %p41
      %p43 = scmp.ne.s32.totalorder %s32, %s33
      %p44 = scmp.eq.s32.totalorder %s24, 0
      %p45 = por %p43, %p44
      %p46 = scmp.ne.s32.totalorder %s32, %s33
      %p47 = scmp.eq.s32.totalorder %s25, 1
      %p48 = por %p46, %p47
      %p50 = scmp.ne.s32.totalorder %s33, %s49
      %p51 = scmp.eq.s32.totalorder %s25, 0
      %p52 = por %p50, %p51
      %s54 = sadd.s32 %s53, 1
      %p57 = scmp.eq.s32.totalorder %s19, 1
      %p58 = scmp.ne.s32.totalorder %s53, %s55
      %p59 = scmp.eq.s32.totalorder %s19, 0
      %p60 = por %p58, %p59
      %p61 = scmp.ne.s32.totalorder %s53, %s55
      %p62 = scmp.eq.s32.totalorder %s24, 1
      %p63 = por %p61, %p62
      %p64 = scmp.ne.s32.totalorder %s55, %s56
      %p65 = scmp.eq.s32.totalorder %s24, 0
      %p66 = por %p64, %p65
      %p67 = scmp.ne.s32.totalorder %s55, %s56
      %p68 = scmp.eq.s32.totalorder %s25, 1
      %p69 = por %p67, %p68
      %p71 = scmp.ne.s32.totalorder %s56, %s70
      %p72 = scmp.eq.s32.totalorder %s25, 0
      %p73 = por %p71, %p72
      %s75 = sadd.s32 %s74, 1
      %p78 = scmp.eq.s32.totalorder %s19, 1
      %p79 = scmp.ne.s32.totalorder %s74, %s76
      %p80 = scmp.eq.s32.totalorder %s19, 0
      %p81 = por %p79, %p80
      %p82 = scmp.ne.s32.totalorder %s74, %s76
      %p83 = scmp.eq.s32.totalorder %s24, 1
      %p84 = por %p82, %p83
      %p85 = scmp.ne.s32.totalorder %s76, %s77
      %p86 = scmp.eq.s32.totalorder %s24, 0
      %p87 = por %p85, %p86
      %p88 = scmp.ne.s32.totalorder %s76, %s77
      %p89 = scmp.eq.s32.totalorder %s25, 1
      %p90 = por %p88, %p89
      %p92 = scmp.ne.s32.totalorder %s77, %s91
      %p93 = scmp.eq.s32.totalorder %s25, 0
      %p94 = por %p92, %p93
      %s96 = sadd.s32 %s95, 1
      %p99 = scmp.eq.s32.totalorder %s19, 1
      %p100 = scmp.ne.s32.totalorder %s95, %s97
      %p101 = scmp.eq.s32.totalorder %s19, 0
      %p102 = por %p100, %p101
      %p103 = scmp.ne.s32.totalorder %s95, %s97
      %p104 = scmp.eq.s32.totalorder %s24, 1
      %p105 = por %p103, %p104
      %p106 = scmp.ne.s32.totalorder %s97, %s98
      %p107 = scmp.eq.s32.totalorder %s24, 0
      %p108 = por %p106, %p107
      %p109 = scmp.ne.s32.totalorder %s97, %s98
      %p110 = scmp.eq.s32.totalorder %s25, 1
      %p111 = por %p109, %p110
      %p113 = scmp.ne.s32.totalorder %s98, %s112
      %p114 = scmp.eq.s32.totalorder %s25, 0
      %p115 = por %p113, %p114
      %s116 = ssub.s32 %s19, %s26
      %p117 = scmp.eq.s32.totalorder %s116, 0
      %s119 = sadd.s32 %s118, 1
      %s120 = scalar_select %p117, %s118, %s119
      %p123 = pneg %p117
      %p124 = scmp.eq.s32.totalorder %s19, 1
      %p125 = por %p123, %p124
      %p126 = scmp.ne.s32.totalorder %s118, %s121
      %p127 = scmp.eq.s32.totalorder %s19, 0
      %p128 = por %p126, %p127
      %p129 = scmp.ne.s32.totalorder %s118, %s121
      %p130 = scmp.eq.s32.totalorder %s24, 1
      %p131 = por %p129, %p130
      %p132 = scmp.ne.s32.totalorder %s121, %s122
      %p133 = scmp.eq.s32.totalorder %s24, 0
      %p134 = por %p132, %p133
      %p135 = scmp.ne.s32.totalorder %s121, %s122
      %p136 = scmp.eq.s32.totalorder %s25, 1
      %p137 = por %p135, %p136
      %p139 = scmp.ne.s32.totalorder %s122, %s138
      %p140 = scmp.eq.s32.totalorder %s25, 0
      %p141 = por %p139, %p140
      %s143 = sadd.s32 %s142, 1
      %p146 = scmp.eq.s32.totalorder %s19, 1
      %p147 = scmp.ne.s32.totalorder %s142, %s144
      %p148 = scmp.eq.s32.totalorder %s19, 0
      %p149 = por %p147, %p148
      %p150 = scmp.ne.s32.totalorder %s142, %s144
      %p151 = scmp.eq.s32.totalorder %s24, 1
      %p152 = por %p150, %p151
      %p153 = scmp.ne.s32.totalorder %s144, %s145
      %p154 = scmp.eq.s32.totalorder %s24, 0
      %p155 = por %p153, %p154
      %p156 = scmp.ne.s32.totalorder %s144, %s145
      %p157 = scmp.eq.s32.totalorder %s25, 1
      %p158 = por %p156, %p157
      %p160 = scmp.ne.s32.totalorder %s145, %s159
      %p161 = scmp.eq.s32.totalorder %s25, 0
      %p162 = por %p160, %p161
      %s164 = sadd.s32 %s163, 1
      %p167 = scmp.eq.s32.totalorder %s19, 1
      %p168 = scmp.ne.s32.totalorder %s163, %s165
      %p169 = scmp.eq.s32.totalorder %s19, 0
      %p170 = por %p168, %p169
      %p171 = scmp.ne.s32.totalorder %s163, %s165
      %p172 = scmp.eq.s32.totalorder %s24, 1
      %p173 = por %p171, %p172
      %p174 = scmp.ne.s32.totalorder %s165, %s166
      %p175 = scmp.eq.s32.totalorder %s24, 0
      %p176 = por %p174, %p175
      %p177 = scmp.ne.s32.totalorder %s165, %s166
      %p178 = scmp.eq.s32.totalorder %s25, 1
      %p179 = por %p177, %p178
      %p181 = scmp.ne.s32.totalorder %s166, %s180
      %p182 = scmp.eq.s32.totalorder %s25, 0
      %p183 = por %p181, %p182
      %p184 = scmp.le.s32.totalorder 1, %s19
      %p185 = scmp.lt.s32.totalorder %s19, 3
      %p186 = pnand %p184, %p185
      %p187 = pneg %p186
      // Predicated region
      $region9: #{tpu_custom_call.1} parent=5 // pred_check
        _
      $region10: #{tpu_custom_call.1} parent=5 // pred_check_branch
        %189 = sbr.rel (%p186) target = $region12
      $region11: #{tpu_custom_call.1} parent=5 // pred_region
        %s190 = ssub.s32 %s19, 1
        // Predicated region
        $region13: #{tpu_custom_call.1} parent=11 // pred_check
          %p191 = pneg %p66
        $region14: #{tpu_custom_call.1} parent=11 // pred_check_branch
          %193 = sbr.rel (%p191) target = $region16
        $region15: #{tpu_custom_call.1} parent=11 // pred_region
          _
        $region16: #{tpu_custom_call.1} parent=11 // pred_fallthru
          _
        // Predicated region
        $region17: #{tpu_custom_call.1} parent=11 // pred_check
          %p194 = pneg %p87
        $region18: #{tpu_custom_call.1} parent=11 // pred_check_branch
          %196 = sbr.rel (%p194) target = $region20
        $region19: #{tpu_custom_call.1} parent=11 // pred_region
          _
        $region20: #{tpu_custom_call.1} parent=11 // pred_fallthru
          _
        // Predicated region
        $region21: #{tpu_custom_call.1} parent=11 // pred_check
          %p197 = pneg %p108
        $region22: #{tpu_custom_call.1} parent=11 // pred_check_branch
          %199 = sbr.rel (%p197) target = $region24
        $region23: #{tpu_custom_call.1} parent=11 // pred_region
          _
        $region24: #{tpu_custom_call.1} parent=11 // pred_fallthru
          _
      $region12: #{tpu_custom_call.1} parent=5 // pred_fallthru
        _
      %p200 = scmp.lt.s32.totalorder %s19, 2
      // Predicated region
      $region25: #{tpu_custom_call.1} parent=5 // pred_check
        %p201 = pneg %p200
      $region26: #{tpu_custom_call.1} parent=5 // pred_check_branch
        %203 = sbr.rel (%p201) target = $region28
      $region27: #{tpu_custom_call.1} parent=5 // pred_region
        // Predicated region
        $region29: #{tpu_custom_call.1} parent=27 // pred_check
          %p204 = pneg %p39
        $region30: #{tpu_custom_call.1} parent=27 // pred_check_branch
          %206 = sbr.rel (%p204) target = $region32
        $region31: #{tpu_custom_call.1} parent=27 // pred_region
          %s207 = sand.u32 %s29, 1
          %s208 = scalar_lea.sflag [#allocation6], %s207
          %s209 = sand.u32 %s29, 1
          %s210 = smul.addr %s209, 48
          %s211 = scalar_lea.vmem [#allocation5], %s210
          %s212 = smul.u32 2, %s19
          %s214 = ssub.s32 768, 768
          %215 = vsyncadd %s208, %s214
          %s216 = smul.addr %s212, 64
          %s217 = scalar_lea.hbm %s0, %s216
          %s218 = sshll.u32 %s211, 4
          %s219 = int_to_ptr.vmem [resolvable:$true] %s218
          %224 = dma.hbm_to_vmem [thread:$0]  %s217, 768, %s219, %s208, 256, 128, 8
        $region32: #{tpu_custom_call.1} parent=27 // pred_fallthru
          _
      $region28: #{tpu_custom_call.1} parent=5 // pred_fallthru
        _
      %p225 = scmp.le.s32.totalorder 1, %s19
      %p226 = scmp.lt.s32.totalorder %s19, 3
      %p227 = pnand %p225, %p226
      %p228 = pneg %p227
      // Predicated region
      $region33: #{tpu_custom_call.1} parent=5 // pred_check
        _
      $region34: #{tpu_custom_call.1} parent=5 // pred_check_branch
        %230 = sbr.rel (%p227) target = $region36
      $region35: #{tpu_custom_call.1} parent=5 // pred_region
        %s231 = ssub.s32 %s19, 1
        %s232 = sand.u32 %s32, 1
        %s233 = scalar_lea.sflag [#allocation6], %s232
        %s234 = sand.u32 %s32, 1
        %s235 = smul.addr %s234, 48
        %s236 = scalar_lea.vmem [#allocation5], %s235
        // Predicated region
        $region37: #{tpu_custom_call.1} parent=35 // pred_check
          %p237 = pneg %p45
        $region38: #{tpu_custom_call.1} parent=35 // pred_check_branch
          %239 = sbr.rel (%p237) target = $region40
        $region39: #{tpu_custom_call.1} parent=35 // pred_region
          %240 = dma.done %s233, 768
        $region40: #{tpu_custom_call.1} parent=35 // pred_fallthru
          _
        %s241 = sand.u32 %s32, 1
        %s242 = scalar_lea.sflag [#allocation6], %s241
        %s243 = sand.u32 %s32, 1
        %s244 = smul.addr %s243, 48
        %s245 = scalar_lea.vmem [#allocation5], %s244
        %p246 = pneg %p45
        %p247 = pneg %p42
        %p248 = pneg %p66
        %p249 = pneg %p63
        %p250 = pneg %p87
        %p251 = pneg %p84
        %p252 = pneg %p108
        %p253 = pneg %p105
        %p254 = pneg %p134
        %p255 = pneg %p131
        %s256 = sand.u32 %s121, 1
        %s257 = scalar_lea.sflag [#allocation7], %s256
        %s258 = sand.u32 %s121, 1
        %s259 = smul.addr %s258, 16
        %s260 = scalar_lea.vmem [#allocation8], %s259
        %p261 = pneg %p155
        %p262 = pneg %p152
        %p263 = pneg %p176
        %p264 = pneg %p173
        %s265 = smul.u32 2, %s24
        %s266 = smul.u32 2, %s24
        %v268 = vld [vmem:[%s1] sm:$0xf]
        %v269 = vld [vmem:[%s236] sm:$0xff]
        %v270 = vld [vmem:[%s236 + $0x8] sm:$0xff]
        %v271 = vld [vmem:[%s236 + $0x10] sm:$0xff]
        %v272 = vld [vmem:[%s236 + $0x18] sm:$0xff]
        %v273 = vld [vmem:[%s236 + $0x20] sm:$0xff]
        %v274 = vld [vmem:[%s236 + $0x28] sm:$0xff]
        %v281 = vunpack.c.l.b16 %v269
        %v282 = vunpack.c.h.b16 %v269
        %v283 = vunpack.c.l.b16 %v270
        %v284 = vunpack.c.h.b16 %v270
        %v285 = vunpack.c.l.b16 %v271
        %v286 = vunpack.c.h.b16 %v271
        %v287 = vunpack.c.l.b16 %v272
        %v288 = vunpack.c.h.b16 %v272
        %v289 = vunpack.c.l.b16 %v273
        %v290 = vunpack.c.h.b16 %v273
        %v291 = vunpack.c.l.b16 %v274
        %v292 = vunpack.c.h.b16 %v274
        %v293 = vpack.c.b16 %v283, %v281
        %v294 = vpack.c.b16 %v284, %v282
        %v295 = vpack.c.b16 %v287, %v285
        %v296 = vpack.c.b16 %v288, %v286
        %v297 = vpack.c.b16 %v291, %v289
        %v298 = vpack.c.b16 %v292, %v290
        %vm305 = vcmask 392192
        %v307 = vsel %vm305, %v268, 0
        %309 = vmatprep.subr.bf16.mxu0 %v294
        %310 = vmatpush1.bf16.msra.mxu0 %v293
        %311 = vmatprep.subr.bf16.mxu0 %v296
        %312 = vmatpush1.bf16.msra.mxu0 %v295
        %313 = vmatprep.subr.bf16.mxu0 %v298
        %314 = vmatpush1.bf16.msra.mxu0 %v297
        %315 = vmatprep.subr.bf16.mxu0 0
        %316 = vmatpush1.bf16.msra.mxu0 0
        %317 = vmatprep.subr.bf16.mxu0 0
        %318 = vmatpush1.bf16.msra.mxu0 0
        %319 = vmatprep.subr.bf16.mxu0 0
        %320 = vmatpush1.bf16.msra.mxu0 0
        %321 = vmatprep.subr.bf16.mxu0 0
        %322 = vmatpush1.bf16.msra.mxu0 0
        %323 = vmatprep.subr.bf16.mxu0 0
        %324 = vmatpush1.bf16.msra.mxu0 0
        %325 = vmatprep.subr.bf16.mxu0 0
        %326 = vmatpush1.bf16.msra.mxu0 0
        %327 = vmatprep.subr.bf16.mxu0 0
        %328 = vmatpush1.bf16.msra.mxu0 0
        %329 = vmatprep.subr.bf16.mxu0 0
        %330 = vmatpush1.bf16.msra.mxu0 0
        %331 = vmatprep.subr.bf16.mxu0 0
        %332 = vmatpush1.bf16.msra.mxu0 0
        %333 = vmatprep.subr.bf16.mxu0 0
        %334 = vmatpush1.bf16.msra.mxu0 0
        %335 = vmatprep.subr.bf16.mxu0 0
        %336 = vmatpush1.bf16.msra.mxu0 0
        %337 = vmatprep.subr.bf16.mxu0 0
        %338 = vmatpush1.bf16.msra.mxu0 0
        %339 = vmatprep.subr.bf16.mxu0 0
        %340 = vmatpush1.bf16.msra.mxu0 0
        %341 = vmatprep.mubr.bf16.mxu0 0
        %342 = vmatmul.mubr.bf16.gmra.mrb[0].mxu0 %v307
        %v343 = vpop.f32.mrb[0].mxu0
        %v344 = vadd.f32 0.0, %v343
        %v345 = vpop.f32.mrb[0].mxu0
        %v346 = vadd.f32 0.0, %v345
        %v347 = vpop.f32.mrb[0].mxu0
        %v348 = vpop.f32.mrb[0].mxu0
        %349 = vdwg.mxu0
        %350 = vst [vmem:[%s260] sm:$0xff] %v344
        %351 = vst [vmem:[%s260 + $0x8] sm:$0xff] %v346
        %v352 = vlaneseq
        %v353 = vand.u32 %v352, 127
        %v354 = vadd.s32 %v353, 128
        %s355 = smul.u32 %s24, 256
        %v356 = vstv %s355
        %v357 = vadd.s32 %v353, %v356
        %v358 = vadd.s32 %v354, %v356
        %vm359 = vcmp.lt.s32.totalorder %v357, 512
        %vm360 = vcmp.lt.s32.totalorder %v358, 512
        %v361 = vsel %vm359, 1, 0
        %v362 = vsel %vm360, 1, 0
        %vm363 = vcmp.eq.s32.totalorder %v361, 1
        %vm364 = vcmp.eq.s32.totalorder %v362, 1
        %v365 = vsel %vm363, %v344, 0.0
        %v366 = vsel %vm364, %v346, 0.0
        %p367 = scmp.eq.s32.totalorder %s24, 0
        // Predicated region
        $region41: #{tpu_custom_call.1} parent=35 // pred_check
          %p368 = pneg %p367
        $region42: #{tpu_custom_call.1} parent=35 // pred_check_branch
          %370 = sbr.rel (%p368) target = $region44
        $region43: #{tpu_custom_call.1} parent=35 // pred_region
          %v371 = vadd.f32 %v365, %v366
          %372 = vadd.xlane.f32.xlu0 %v371
          %v373 = vpop.xlane.xlu0 %372
          %v374 = vmul.f32 %v373, 0.00390625
          %vm375 = vcmask 7168
          %376 = vst.msk [vmem:[#allocation4] sm:$0xff] %vm375, %v374
          %377 = vst.msk [vmem:[#allocation2] sm:$0xff] %vm375, 0.0
          %378 = vst.msk [vmem:[#allocation3] sm:$0xff] %vm375, 0.0
          %379 = vst.msk [vmem:[%s5] sm:$0xff] %vm375, 0.0
          %380 = vst.msk [vmem:[%s6] sm:$0xff] %vm375, 0.0
        $region44: #{tpu_custom_call.1} parent=35 // pred_fallthru
          _
        %v381 = vld [vmem:[#allocation2] sm:$0xff]
        %v382 = vadd.f32 %v365, %v366
        %383 = vadd.xlane.f32.xlu0 %v382
        %v384 = vpop.xlane.xlu0 %383
        %v385 = vadd.f32 %v381, %v384
        %vm386 = vcmask 7168
        %387 = vst.msk [vmem:[#allocation2] sm:$0xff] %vm386, %v385
        %v388 = vld [vmem:[#allocation4] sm:$0xff]
        %390 = vset.pattern.permute.xlu0 0
        %391 = vperm.xlu0 %390, %v388
        %v392 = vpop.permute.xlu0 %391
        %v394 = vsub.f32 %v344, %v392
        %v395 = vsub.f32 %v346, %v392
        %v396 = vsel %vm363, %v394, 0.0
        %v397 = vsel %vm364, %v395, 0.0
        %v398 = vld [vmem:[#allocation3] sm:$0xff]
        %v399 = vmul.f32 %v396, %v396
        %v400 = vmul.f32 %v397, %v397
        %v401 = vadd.f32 %v399, %v400
        %402 = vadd.xlane.f32.xlu0 %v401
        %v403 = vpop.xlane.xlu0 %402
        %v404 = vadd.f32 %v398, %v403
        %405 = vst.msk [vmem:[#allocation3] sm:$0xff] %vm386, %v404
        %p406 = scmp.eq.s32.totalorder %s24, 1
        // Predicated region
        $region45: #{tpu_custom_call.1} parent=35 // pred_check
          %p407 = pneg %p406
        $region46: #{tpu_custom_call.1} parent=35 // pred_check_branch
          %409 = sbr.rel (%p407) target = $region48
        $region47: #{tpu_custom_call.1} parent=35 // pred_region
          %v410 = vld [vmem:[#allocation2] sm:$0xff]
          %v411 = vmul.f32 %v410, 0.001953125
          %v412 = vld [vmem:[#allocation4] sm:$0xff]
          %v413 = vsub.f32 %v411, %v412
          %v414 = vld [vmem:[#allocation3] sm:$0xff]
          %v415 = vmul.f32 %v414, 0.001953125
          %v416 = vmul.f32 %v413, %v413
          %v417 = vsub.f32 %v415, %v416
          %v418 = vmax.f32 %v417, 0.0
          %v419 = vadd.f32 %v418, 1e-05
          %v420 = vrsqrt.pop %v419
          %v421 = vld [vmem:[%s2] sm:$0xff]
          %v422 = vmul.f32 %v421, %v420
          %423 = vst.msk [vmem:[%s5] sm:$0xff] %vm386, %v422
          %v424 = vld [vmem:[%s3] sm:$0xff]
          %v425 = vmul.f32 %v411, %v422
          %v426 = vsub.f32 %v424, %v425
          %427 = vst.msk [vmem:[%s6] sm:$0xff] %vm386, %v426
        $region48: #{tpu_custom_call.1} parent=35 // pred_fallthru
          _
        %s428 = sand.u32 %s121, 1
        %s429 = scalar_lea.sflag [#allocation7], %s428
        %s430 = sand.u32 %s121, 1
        %s431 = smul.addr %s430, 16
        %s432 = scalar_lea.vmem [#allocation8], %s431
        // Predicated region
        $region49: #{tpu_custom_call.1} parent=35 // pred_check
          %p433 = pneg %p131
        $region50: #{tpu_custom_call.1} parent=35 // pred_check_branch
          %435 = sbr.rel (%p433) target = $region52
        $region51: #{tpu_custom_call.1} parent=35 // pred_region
          %s436 = smul.u32 2, %s24
          %s438 = ssub.s32 256, 256
          %439 = vsyncadd %s429, %s438
          %s440 = smul.addr %s436, 128
          %s441 = scalar_lea.hbm %s4, %s440
          %s443 = sshll.u32 %s432, 4
          %s444 = int_to_ptr.vmem [resolvable:$true] %s443
          %446 = dma.vmem_to_hbm [thread:$0]  %s444, 256, %s441, %s429
        $region52: #{tpu_custom_call.1} parent=35 // pred_fallthru
          _
        // Predicated region
        $region53: #{tpu_custom_call.1} parent=35 // pred_check
          %p447 = pneg %p152
        $region54: #{tpu_custom_call.1} parent=35 // pred_check_branch
          %449 = sbr.rel (%p447) target = $region56
        $region55: #{tpu_custom_call.1} parent=35 // pred_region
          _
        $region56: #{tpu_custom_call.1} parent=35 // pred_fallthru
          _
        // Predicated region
        $region57: #{tpu_custom_call.1} parent=35 // pred_check
          %p450 = pneg %p173
        $region58: #{tpu_custom_call.1} parent=35 // pred_check_branch
          %452 = sbr.rel (%p450) target = $region60
        $region59: #{tpu_custom_call.1} parent=35 // pred_region
          _
        $region60: #{tpu_custom_call.1} parent=35 // pred_fallthru
          _
        // Predicated region
        $region61: #{tpu_custom_call.1} parent=35 // pred_check
          %p453 = pneg %p152
        $region62: #{tpu_custom_call.1} parent=35 // pred_check_branch
          %455 = sbr.rel (%p453) target = $region64
        $region63: #{tpu_custom_call.1} parent=35 // pred_region
          _
        $region64: #{tpu_custom_call.1} parent=35 // pred_fallthru
          _
        // Predicated region
        $region65: #{tpu_custom_call.1} parent=35 // pred_check
          %p456 = pneg %p173
        $region66: #{tpu_custom_call.1} parent=35 // pred_check_branch
          %458 = sbr.rel (%p456) target = $region68
        $region67: #{tpu_custom_call.1} parent=35 // pred_region
          _
        $region68: #{tpu_custom_call.1} parent=35 // pred_fallthru
          _
      $region36: #{tpu_custom_call.1} parent=5 // pred_fallthru
        _
      %p459 = scmp.le.s32.totalorder 2, %s19
      // Predicated region
      $region69: #{tpu_custom_call.1} parent=5 // pred_check
        %p460 = pneg %p459
      $region70: #{tpu_custom_call.1} parent=5 // pred_check_branch
        %462 = sbr.rel (%p460) target = $region72
      $region71: #{tpu_custom_call.1} parent=5 // pred_region
        %s463 = ssub.s32 %s19, 2
        // Predicated region
        $region73: #{tpu_custom_call.1} parent=71 // pred_check
          %p464 = pneg %p137
        $region74: #{tpu_custom_call.1} parent=71 // pred_check_branch
          %466 = sbr.rel (%p464) target = $region76
        $region75: #{tpu_custom_call.1} parent=71 // pred_region
          %s467 = sand.u32 %s122, 1
          %s468 = scalar_lea.sflag [#allocation7], %s467
          %s469 = sand.u32 %s122, 1
          %s470 = smul.addr %s469, 16
          %s471 = scalar_lea.vmem [#allocation8], %s470
          %472 = dma.done %s468, 256
        $region76: #{tpu_custom_call.1} parent=71 // pred_fallthru
          _
      $region72: #{tpu_custom_call.1} parent=5 // pred_fallthru
        _
    $region6: #{tpu_custom_call.1} parent=1 // loop_footer
      %s23 = sadd.s32 1, %s19
    $region7: #{tpu_custom_call.1} parent=1 // loop_footer_branch
      %18 = sbr.rel target = $region3
    $region8: #{tpu_custom_call.1} parent=1 // loop_exit
      _
    %473 = vsyncpa [#allocation6], 1
    %s474 = scalar_lea.sflag [#allocation6], 1
    %475 = vsyncpa %s474, 1
    %476 = vsyncpa [#allocation7], 1
    %s477 = scalar_lea.sflag [#allocation7], 1
    %478 = vsyncpa %s477, 1

</llo_original>
